<compile_context>
chip_gen: v5e
topology: v5e:2x2
jax: 0.10.0
libtpu: 0.0.40
codegen_flags: <defaults>
</compile_context>

<pallas_src>
import functools

import jax
import jax.numpy as jnp
from jax.experimental import pallas as pl
from jax.experimental.pallas import tpu as pltpu


def _cdiv(a, b):
    return (a + b - 1) // b


def _round_up(x, m):
    return _cdiv(x, m) * m


def _encoder_kernel(x_ref, w1_ref, b1_ref, w2_ref, b2_ref, w3_ref, b3_ref,
                    out_ref):
    # Layer 1: (TB, Kp) @ (Kp, 512) + (1, 512), ReLU  (bf16 matmul, f32 acc)
    h = jnp.dot(x_ref[...], w1_ref[...], preferred_element_type=jnp.float32)
    h = jnp.maximum(h + b1_ref[...], 0.0)
    # Layer 2: (TB, 512) @ (512, 256) + (1, 256), ReLU
    h = jnp.dot(h.astype(w2_ref.dtype), w2_ref[...],
                preferred_element_type=jnp.float32)
    h = jnp.maximum(h + b2_ref[...], 0.0)
    # Fused heads: (TB, 256) @ (256, head_p) -> [mu | logvar | pad], lane-dense
    out = jnp.dot(h.astype(w3_ref.dtype), w3_ref[...],
                  preferred_element_type=jnp.float32)
    out_ref[...] = (out + b3_ref[...]).astype(out_ref.dtype)


def pack_params(params, matmul_dtype=jnp.bfloat16):
    """One-time weight packing: pad/cast/fuse so the per-call wrapper is free.

    Returns arrays only (safe to pass through jit):
      w1: (round_up(input_dim,128), 512)  bf16, K zero-padded
      w2: (512, 256)                      bf16
      w3: (256, round_up(2*latent,128))   bf16, [w31 | w32 | 0-pad]
      b1: (1, 512)   f32
      b2: (1, 256)   f32
      b3: (1, head_p) f32, [b31 | b32 | 0-pad]
    """
    d_in = params["w1"].shape[0]
    latent = params["w31"].shape[1]
    d_in_p = _round_up(d_in, 128)
    head = 2 * latent
    head_p = _round_up(head, 128)

    w1 = jnp.pad(params["w1"].astype(matmul_dtype),
                 ((0, d_in_p - d_in), (0, 0)))
    w2 = params["w2"].astype(matmul_dtype)
    w3 = jnp.concatenate([params["w31"], params["w32"]],
                         axis=1).astype(matmul_dtype)
    w3 = jnp.pad(w3, ((0, 0), (0, head_p - head)))

    b1 = params["b1"].astype(jnp.float32)
    b2 = params["b2"].astype(jnp.float32)
    b3 = jnp.concatenate([params["b31"], params["b32"]],
                         axis=1).astype(jnp.float32)
    b3 = jnp.pad(b3, ((0, 0), (0, head_p - head)))
    return dict(w1=w1, b1=b1, w2=w2, b2=b2, w3=w3, b3=b3)


@functools.partial(jax.jit,
                   static_argnames=("latent_dim", "block_b", "out_dtype"))
def encoder_forward(x, packed, latent_dim, block_b=1024,
                    out_dtype=jnp.bfloat16):
    """x: (B, input_dim) f32. packed: output of pack_params. Returns (mu, lv)."""
    B, d_in = x.shape
    d_in_p, H1 = packed["w1"].shape          # padded K, 512
    H2 = packed["w2"].shape[1]               # 256
    head_p = packed["w3"].shape[1]           # lane-dense fused head width
    head = 2 * latent_dim
    mm_dtype = packed["w1"].dtype

    # ---- batch tiling: minimize padding waste, 16-row (bf16 vreg) multiples,
    #      and keep >=2 grid steps on large batches so v7x's 2 TCs both run.
    ntiles = _cdiv(B, block_b)
    if B >= 2 * min(block_b, 256):
        ntiles = max(ntiles, 2)
    bb = _round_up(_cdiv(B, ntiles), 16)
    B_p = ntiles * bb

    # ---- input: single fused pad+cast (no zeros + scatter round-trip)
    x_c = x.astype(mm_dtype)
    if B_p != B or d_in_p != d_in:
        x_c = jnp.pad(x_c, ((0, B_p - B), (0, d_in_p - d_in)))

    # ---- VMEM budget (double-buffered tiles + f32 intermediates + weights)
    mm_bytes = jnp.dtype(mm_dtype).itemsize
    out_bytes = jnp.dtype(out_dtype).itemsize
    vmem_needed = (
        2 * bb * d_in_p * mm_bytes           # x tile (double-buffered)
        + 2 * bb * head_p * out_bytes        # out tile (double-buffered)
        + bb * (H1 + H2) * 4                 # f32 intermediates
        + (d_in_p * H1 + H1 * H2 + H2 * head_p) * mm_bytes
        + (H1 + H2 + head_p) * 4)
    vmem_limit = None
    if vmem_needed > 24 * 1024 * 1024:
        vmem_limit = int(min(2 * vmem_needed, 128 * 1024 * 1024))

    # ---- advisory cost hint for XLA scheduling
    flops = 2 * B_p * (d_in_p * H1 + H1 * H2 + H2 * head_p)
    bytes_accessed = (
        B_p * d_in_p * mm_bytes
        + (d_in_p * H1 + H1 * H2 + H2 * head_p) * mm_bytes
        + (H1 + H2 + head_p) * 4
        + B_p * head_p * out_bytes)

    def full_spec(shape):
        return pl.BlockSpec(shape, lambda i: (0, 0))

    out = pl.pallas_call(
        _encoder_kernel,
        out_shape=jax.ShapeDtypeStruct((B_p, head_p), out_dtype),
        grid_spec=pltpu.PrefetchScalarGridSpec(
            num_scalar_prefetch=0,
            grid=(ntiles,),
            in_specs=[
                pl.BlockSpec((bb, d_in_p), lambda i: (i, 0)),   # x tile
                full_spec((d_in_p, H1)),                        # w1 (resident)
                full_spec((1, H1)),                             # b1
                full_spec((H1, H2)),                            # w2
                full_spec((1, H2)),                             # b2
                full_spec((H2, head_p)),                        # fused w31|w32
                full_spec((1, head_p)),                         # fused b31|b32
            ],
            out_specs=pl.BlockSpec((bb, head_p), lambda i: (i, 0)),
        ),
        compiler_params=pltpu.CompilerParams(
            dimension_semantics=("parallel",),
            vmem_limit_bytes=vmem_limit,
        ),
        cost_estimate=pl.CostEstimate(
            flops=flops, transcendentals=0, bytes_accessed=bytes_accessed),
    )(x_c, packed["w1"], packed["b1"], packed["w2"], packed["b2"],
      packed["w3"], packed["b3"])

    mu = out[:B, :latent_dim].astype(x.dtype)
    logvar = out[:B, latent_dim:head].astype(x.dtype)
    return mu, logvar


def init_params(key, input_dim, latent_dim):
    """Deterministic synthetic init (PyTorch Linear-style uniform bounds)."""
    def linear(key, fan_in, fan_out):
        kw, kb = jax.random.split(key)
        bound = 1.0 / jnp.sqrt(fan_in)
        # Stored as (in, out) so the kernel does x @ W (== PyTorch x @ W^T).
        w = jax.random.uniform(kw, (fan_in, fan_out), jnp.float32, -bound, bound)
        b = jax.random.uniform(kb, (1, fan_out), jnp.float32, -bound, bound)
        return w, b

    k1, k2, k31, k32 = jax.random.split(key, 4)
    w1, b1 = linear(k1, input_dim, 512)
    w2, b2 = linear(k2, 512, 256)
    w31, b31 = linear(k31, 256, latent_dim)
    w32, b32 = linear(k32, 256, latent_dim)
    return dict(w1=w1, b1=b1, w2=w2, b2=b2,
                w31=w31, b31=b31, w32=w32, b32=b32)


def encoder_reference(x, p, dtype=jnp.bfloat16):
    """Reference with the same bf16-input / f32-accumulate matmul numerics."""
    c = lambda a: a.astype(dtype)
    h = jnp.maximum(jnp.dot(c(x), c(p["w1"]),
                            preferred_element_type=jnp.float32) + p["b1"], 0.0)
    h = jnp.maximum(jnp.dot(c(h), c(p["w2"]),
                            preferred_element_type=jnp.float32) + p["b2"], 0.0)
    mu = jnp.dot(c(h), c(p["w31"]), preferred_element_type=jnp.float32) + p["b31"]
    lv = jnp.dot(c(h), c(p["w32"]), preferred_element_type=jnp.float32) + p["b32"]
    return mu, lv


if __name__ == "__main__":
    key = jax.random.PRNGKey(0)
    kx, kp = jax.random.split(key)

    batch, input_dim, latent_dim = 16, 64, 32
    x = jax.random.normal(kx, (batch, input_dim), jnp.float32)
    params = init_params(kp, input_dim, latent_dim)

    packed = pack_params(params)                      # one-time weight packing
    mu, logvar = encoder_forward(x, packed, latent_dim)
    jax.block_until_ready((mu, logvar))

    mu_ref, logvar_ref = encoder_reference(x, params)
    assert mu.shape == (batch, latent_dim) and logvar.shape == (batch, latent_dim)
    assert jnp.allclose(mu, mu_ref, atol=5e-2, rtol=5e-2)
    assert jnp.allclose(logvar, logvar_ref, atol=5e-2, rtol=5e-2)

    print("KERNEL_OK")
</pallas_src>

<mosaic_0001>
module attributes {stable_mosaic.version = 11 : i64} {
  func.func @_encoder_kernel(%arg0: i32, %arg1: memref<16x128xbf16, #tpu.memory_space<vmem>>, %arg2: memref<128x512xbf16, #tpu.memory_space<vmem>>, %arg3: memref<1x512xf32, #tpu.memory_space<vmem>>, %arg4: memref<512x256xbf16, #tpu.memory_space<vmem>>, %arg5: memref<1x256xf32, #tpu.memory_space<vmem>>, %arg6: memref<256x128xbf16, #tpu.memory_space<vmem>>, %arg7: memref<1x128xf32, #tpu.memory_space<vmem>>, %arg8: memref<16x128xbf16, #tpu.memory_space<vmem>>) attributes {dimension_semantics = [#tpu.dimension_semantics<parallel>], iteration_bounds = array<i64: 1>, scalar_prefetch = 0 : i64, scratch_operands = 0 : i64, tpu.core_type = #tpu.core_type<tc>, window_params = [{transform_indices = @transform_0, window_bounds = array<i64: 16, 128>}, {pipeline_mode = #tpu.pipeline_mode<synchronous>, transform_indices = @transform_1, window_bounds = array<i64: 128, 512>}, {pipeline_mode = #tpu.pipeline_mode<synchronous>, transform_indices = @transform_2, window_bounds = array<i64: 1, 512>}, {pipeline_mode = #tpu.pipeline_mode<synchronous>, transform_indices = @transform_3, window_bounds = array<i64: 512, 256>}, {pipeline_mode = #tpu.pipeline_mode<synchronous>, transform_indices = @transform_4, window_bounds = array<i64: 1, 256>}, {pipeline_mode = #tpu.pipeline_mode<synchronous>, transform_indices = @transform_5, window_bounds = array<i64: 256, 128>}, {pipeline_mode = #tpu.pipeline_mode<synchronous>, transform_indices = @transform_6, window_bounds = array<i64: 1, 128>}, {transform_indices = @transform_7, window_bounds = array<i64: 16, 128>}]} {
    %c0 = arith.constant 0 : index
    %c0_0 = arith.constant 0 : index
    %0 = vector.load %arg1[%c0, %c0_0] : memref<16x128xbf16, #tpu.memory_space<vmem>>, vector<16x128xbf16>
    %c0_1 = arith.constant 0 : index
    %c0_2 = arith.constant 0 : index
    %1 = vector.load %arg2[%c0_1, %c0_2] : memref<128x512xbf16, #tpu.memory_space<vmem>>, vector<128x512xbf16>
    %cst = arith.constant dense<0.000000e+00> : vector<16x512xf32>
    %2 = tpu.matmul %0, %1, %cst {dimension_numbers = #tpu.dot_dimension_numbers<[1], [0], [0], [1], [0, 0, 1, 1], [], []>} : vector<16x128xbf16>, vector<128x512xbf16>, vector<16x512xf32> -> vector<16x512xf32>
    %c0_3 = arith.constant 0 : index
    %c0_4 = arith.constant 0 : index
    %3 = vector.load %arg3[%c0_3, %c0_4] : memref<1x512xf32, #tpu.memory_space<vmem>>, vector<1x512xf32>
    %4 = vector.broadcast %3 : vector<1x512xf32> to vector<16x512xf32>
    %5 = arith.addf %2, %4 : vector<16x512xf32>
    %cst_5 = arith.constant 0.000000e+00 : f32
    %6 = vector.broadcast %cst_5 : f32 to vector<16x512xf32>
    %7 = arith.maximumf %5, %6 : vector<16x512xf32>
    %8 = arith.truncf %7 : vector<16x512xf32> to vector<16x512xbf16>
    %c0_6 = arith.constant 0 : index
    %c0_7 = arith.constant 0 : index
    %9 = vector.load %arg4[%c0_6, %c0_7] : memref<512x256xbf16, #tpu.memory_space<vmem>>, vector<512x256xbf16>
    %cst_8 = arith.constant dense<0.000000e+00> : vector<16x256xf32>
    %10 = tpu.matmul %8, %9, %cst_8 {dimension_numbers = #tpu.dot_dimension_numbers<[1], [0], [0], [1], [0, 0, 1, 1], [], []>} : vector<16x512xbf16>, vector<512x256xbf16>, vector<16x256xf32> -> vector<16x256xf32>
    %c0_9 = arith.constant 0 : index
    %c0_10 = arith.constant 0 : index
    %11 = vector.load %arg5[%c0_9, %c0_10] : memref<1x256xf32, #tpu.memory_space<vmem>>, vector<1x256xf32>
    %12 = vector.broadcast %11 : vector<1x256xf32> to vector<16x256xf32>
    %13 = arith.addf %10, %12 : vector<16x256xf32>
    %cst_11 = arith.constant 0.000000e+00 : f32
    %14 = vector.broadcast %cst_11 : f32 to vector<16x256xf32>
    %15 = arith.maximumf %13, %14 : vector<16x256xf32>
    %16 = arith.truncf %15 : vector<16x256xf32> to vector<16x256xbf16>
    %c0_12 = arith.constant 0 : index
    %c0_13 = arith.constant 0 : index
    %17 = vector.load %arg6[%c0_12, %c0_13] : memref<256x128xbf16, #tpu.memory_space<vmem>>, vector<256x128xbf16>
    %cst_14 = arith.constant dense<0.000000e+00> : vector<16x128xf32>
    %18 = tpu.matmul %16, %17, %cst_14 {dimension_numbers = #tpu.dot_dimension_numbers<[1], [0], [0], [1], [0, 0, 1, 1], [], []>} : vector<16x256xbf16>, vector<256x128xbf16>, vector<16x128xf32> -> vector<16x128xf32>
    %c0_15 = arith.constant 0 : index
    %c0_16 = arith.constant 0 : index
    %19 = vector.load %arg7[%c0_15, %c0_16] : memref<1x128xf32, #tpu.memory_space<vmem>>, vector<1x128xf32>
    %20 = vector.broadcast %19 : vector<1x128xf32> to vector<16x128xf32>
    %21 = arith.addf %18, %20 : vector<16x128xf32>
    %22 = arith.truncf %21 : vector<16x128xf32> to vector<16x128xbf16>
    %c0_17 = arith.constant 0 : index
    %c0_18 = arith.constant 0 : index
    %23 = vector.load %arg8[%c0_17, %c0_18] : memref<16x128xbf16, #tpu.memory_space<vmem>>, vector<16x128xbf16>
    tpu.vector_store %arg8[%c0_17, %c0_18], %22 {strides = array<i32>} : memref<16x128xbf16, #tpu.memory_space<vmem>>, vector<16x128xbf16>,
    return
  }
  func.func @transform_0(%arg0: i32) -> (i32, i32) {
    %c0_i32 = arith.constant 0 : i32
    %c0_i32_0 = arith.constant 0 : i32
    return %arg0, %c0_i32 : i32, i32
  }
  func.func @transform_1(%arg0: i32) -> (i32, i32) {
    %c0_i32 = arith.constant 0 : i32
    %c0_i32_0 = arith.constant 0 : i32
    %c0_i32_1 = arith.constant 0 : i32
    return %c0_i32, %c0_i32_0 : i32, i32
  }
  func.func @transform_2(%arg0: i32) -> (i32, i32) {
    %c0_i32 = arith.constant 0 : i32
    %c0_i32_0 = arith.constant 0 : i32
    %c0_i32_1 = arith.constant 0 : i32
    return %c0_i32, %c0_i32_0 : i32, i32
  }
  func.func @transform_3(%arg0: i32) -> (i32, i32) {
    %c0_i32 = arith.constant 0 : i32
    %c0_i32_0 = arith.constant 0 : i32
    %c0_i32_1 = arith.constant 0 : i32
    return %c0_i32, %c0_i32_0 : i32, i32
  }
  func.func @transform_4(%arg0: i32) -> (i32, i32) {
    %c0_i32 = arith.constant 0 : i32
    %c0_i32_0 = arith.constant 0 : i32
    %c0_i32_1 = arith.constant 0 : i32
    return %c0_i32, %c0_i32_0 : i32, i32
  }
  func.func @transform_5(%arg0: i32) -> (i32, i32) {
    %c0_i32 = arith.constant 0 : i32
    %c0_i32_0 = arith.constant 0 : i32
    %c0_i32_1 = arith.constant 0 : i32
    return %c0_i32, %c0_i32_0 : i32, i32
  }
  func.func @transform_6(%arg0: i32) -> (i32, i32) {
    %c0_i32 = arith.constant 0 : i32
    %c0_i32_0 = arith.constant 0 : i32
    %c0_i32_1 = arith.constant 0 : i32
    return %c0_i32, %c0_i32_0 : i32, i32
  }
  func.func @transform_7(%arg0: i32) -> (i32, i32) {
    %c0_i32 = arith.constant 0 : i32
    %c0_i32_0 = arith.constant 0 : i32
    return %arg0, %c0_i32 : i32, i32
  }
}

</mosaic_0001>

<llo_original>
// kernel: encoder_forward.1
$region0: #{encoder_forward.1}
  #allocation0 [shape = 'u32[]', space=smem, size = 0x4, offset = 0x4, fixed_abs, tag = 'smem constant byte address 0x4 - core index']
  #allocation1 [shape = 'u32[72,128]{1,0:T(1,128)}', space=vmem, size = 0x9000, scoped, tag = 'internal scratch']
  %s0 = inlined_call_operand.vmem [shape: bf16[16,128], index: 0, kind: input, shape index: {}]
  %s1 = inlined_call_operand.hbm [shape: bf16[128,512], index: 1, kind: input, shape index: {}]
  %s2 = inlined_call_operand.vmem [shape: f32[1,512], index: 2, kind: input, shape index: {}]
  %s3 = inlined_call_operand.hbm [shape: bf16[512,256], index: 3, kind: input, shape index: {}]
  %s4 = inlined_call_operand.vmem [shape: f32[1,256], index: 4, kind: input, shape index: {}]
  %s5 = inlined_call_operand.hbm [shape: bf16[256,128], index: 5, kind: input, shape index: {}]
  %s6 = inlined_call_operand.vmem [shape: f32[1,128], index: 6, kind: input, shape index: {}]
  %s7 = inlined_call_operand.vmem [shape: bf16[16,128], index: 7, kind: output, shape index: {}]
  %s8 = sld [smem:[#allocation0]]
  $region50: #{encoder_forward.1} parent=0
    _
  %s10 = ssub.s32 1, %s8
  %s11 = scalar_select 0, %s10, %s8
  $region1: #{encoder_forward.1} parent=0
    #allocation2 [shape = 'u8[131072]{0}', space=vmem, size = 0x20000, scoped, tag = 'input window, operand 1, single buffered']
    #allocation3 [shape = 's32[1]{0}', space=sflag, size = 0x4, scoped, tag = 'scoped memory for encoder_forward.1']
    #allocation4 [shape = 'u8[262144]{0}', space=vmem, size = 0x40000, scoped, tag = 'input window, operand 3, single buffered']
    #allocation5 [shape = 's32[1]{0}', space=sflag, size = 0x4, scoped, tag = 'scoped memory for encoder_forward.1']
    #allocation6 [shape = 'u8[65536]{0}', space=vmem, size = 0x10000, scoped, tag = 'input window, operand 5, single buffered']
    %12 = vsyncpa [#allocation3], 0
    %13 = vsyncpa [#allocation5], 0
    // Predicated region
    $region2: #{encoder_forward.1} parent=1 // pred_check
      _
    $region3: #{encoder_forward.1} parent=1 // pred_check_branch
      %15 = sbr.rel (0) target = $region5
    $region4: #{encoder_forward.1} parent=1 // pred_region
      _
    $region5: #{encoder_forward.1} parent=1 // pred_fallthru
      _
    // Predicated region
    $region6: #{encoder_forward.1} parent=1 // pred_check
      _
    $region7: #{encoder_forward.1} parent=1 // pred_check_branch
      %17 = sbr.rel (0) target = $region9
    $region8: #{encoder_forward.1} parent=1 // pred_region
      %19 = vsyncadd [#allocation3], 0
      %s20 = sshll.u32 %s1, 4
      %s21 = int_to_ptr.hbm [resolvable:$true] %s20
      %s22 = sshll.u32 [#allocation2], 4
      %s23 = int_to_ptr.vmem [resolvable:$true] %s22
      %28 = dma.hbm_to_vmem [thread:$0]  %s21, 4096, %s23, [#allocation3], 256, 256, 16
    $region9: #{encoder_forward.1} parent=1 // pred_fallthru
      _
    // Predicated region
    $region10: #{encoder_forward.1} parent=1 // pred_check
      _
    $region11: #{encoder_forward.1} parent=1 // pred_check_branch
      %30 = sbr.rel (0) target = $region13
    $region12: #{encoder_forward.1} parent=1 // pred_region
      _
    $region13: #{encoder_forward.1} parent=1 // pred_fallthru
      _
    // Predicated region
    $region14: #{encoder_forward.1} parent=1 // pred_check
      _
    $region15: #{encoder_forward.1} parent=1 // pred_check_branch
      %32 = sbr.rel (0) target = $region17
    $region16: #{encoder_forward.1} parent=1 // pred_region
      %34 = vsyncadd [#allocation5], 0
      %s35 = sshll.u32 %s3, 4
      %s36 = int_to_ptr.hbm [resolvable:$true] %s35
      %s37 = sshll.u32 [#allocation4], 4
      %s38 = int_to_ptr.vmem [resolvable:$true] %s37
      %43 = dma.hbm_to_vmem [thread:$0]  %s36, 8192, %s38, [#allocation5], 128, 128, 8
    $region17: #{encoder_forward.1} parent=1 // pred_fallthru
      _
    // Predicated region
    $region18: #{encoder_forward.1} parent=1 // pred_check
      _
    $region19: #{encoder_forward.1} parent=1 // pred_check_branch
      %45 = sbr.rel (0) target = $region21
    $region20: #{encoder_forward.1} parent=1 // pred_region
      _
    $region21: #{encoder_forward.1} parent=1 // pred_fallthru
      _
    // Predicated region
    $region22: #{encoder_forward.1} parent=1 // pred_check
      _
    $region23: #{encoder_forward.1} parent=1 // pred_check_branch
      %47 = sbr.rel (0) target = $region25
    $region24: #{encoder_forward.1} parent=1 // pred_region
      %49 = vsyncadd [#allocation5], 0
      %s50 = sshll.u32 %s5, 4
      %s51 = int_to_ptr.hbm [resolvable:$true] %s50
      %s52 = sshll.u32 [#allocation6], 4
      %s53 = int_to_ptr.vmem [resolvable:$true] %s52
      %58 = dma.hbm_to_vmem [thread:$0]  %s51, 2048, %s53, [#allocation5], 64, 64, 4
    $region25: #{encoder_forward.1} parent=1 // pred_fallthru
      _
    // Predicated region
    $region26: #{encoder_forward.1} parent=1 // pred_check
      _
    $region27: #{encoder_forward.1} parent=1 // pred_check_branch
      %60 = sbr.rel (0) target = $region29
    $region28: #{encoder_forward.1} parent=1 // pred_region
      _
    $region29: #{encoder_forward.1} parent=1 // pred_fallthru
      _
    // Predicated region
    $region30: #{encoder_forward.1} parent=1 // pred_check
      _
    $region31: #{encoder_forward.1} parent=1 // pred_check_branch
      %62 = sbr.rel (0) target = $region33
    $region32: #{encoder_forward.1} parent=1 // pred_region
      %64 = dma.done [#allocation3], 4096
    $region33: #{encoder_forward.1} parent=1 // pred_fallthru
      _
    // Predicated region
    $region34: #{encoder_forward.1} parent=1 // pred_check
      _
    $region35: #{encoder_forward.1} parent=1 // pred_check_branch
      %66 = sbr.rel (0) target = $region37
    $region36: #{encoder_forward.1} parent=1 // pred_region
      %68 = dma.done [#allocation5], 8192
    $region37: #{encoder_forward.1} parent=1 // pred_fallthru
      _
    // Predicated region
    $region38: #{encoder_forward.1} parent=1 // pred_check
      _
    $region39: #{encoder_forward.1} parent=1 // pred_check_branch
      %70 = sbr.rel (0) target = $region41
    $region40: #{encoder_forward.1} parent=1 // pred_region
      %72 = dma.done [#allocation5], 2048
    $region41: #{encoder_forward.1} parent=1 // pred_fallthru
      _
    %v73 = vld [vmem:[%s0] sm:$0xf]
    %v74 = vld [vmem:[%s0 + $0x4] sm:$0xf]
    %v75 = vld [vmem:[#allocation2] sm:$0xff]
    %v76 = vld [vmem:[#allocation2 + $0x8] sm:$0xff]
    %v77 = vld [vmem:[#allocation2 + $0x10] sm:$0xff]
    %v78 = vld [vmem:[#allocation2 + $0x18] sm:$0xff]
    %v79 = vld [vmem:[#allocation2 + $0x20] sm:$0xff]
    %v80 = vld [vmem:[#allocation2 + $0x28] sm:$0xff]
    %v81 = vld [vmem:[#allocation2 + $0x30] sm:$0xff]
    %v82 = vld [vmem:[#allocation2 + $0x38] sm:$0xff]
    %v83 = vld [vmem:[#allocation2 + $0x40] sm:$0xff]
    %v84 = vld [vmem:[#allocation2 + $0x48] sm:$0xff]
    %v85 = vld [vmem:[#allocation2 + $0x50] sm:$0xff]
    %v86 = vld [vmem:[#allocation2 + $0x58] sm:$0xff]
    %v87 = vld [vmem:[#allocation2 + $0x60] sm:$0xff]
    %v88 = vld [vmem:[#allocation2 + $0x68] sm:$0xff]
    %v89 = vld [vmem:[#allocation2 + $0x70] sm:$0xff]
    %v90 = vld [vmem:[#allocation2 + $0x78] sm:$0xff]
    %v91 = vld [vmem:[#allocation2 + $0x80] sm:$0xff]
    %v92 = vld [vmem:[#allocation2 + $0x88] sm:$0xff]
    %v93 = vld [vmem:[#allocation2 + $0x90] sm:$0xff]
    %v94 = vld [vmem:[#allocation2 + $0x98] sm:$0xff]
    %v95 = vld [vmem:[#allocation2 + $0xa0] sm:$0xff]
    %v96 = vld [vmem:[#allocation2 + $0xa8] sm:$0xff]
    %v97 = vld [vmem:[#allocation2 + $0xb0] sm:$0xff]
    %v98 = vld [vmem:[#allocation2 + $0xb8] sm:$0xff]
    %v99 = vld [vmem:[#allocation2 + $0xc0] sm:$0xff]
    %v100 = vld [vmem:[#allocation2 + $0xc8] sm:$0xff]
    %v101 = vld [vmem:[#allocation2 + $0xd0] sm:$0xff]
    %v102 = vld [vmem:[#allocation2 + $0xd8] sm:$0xff]
    %v103 = vld [vmem:[#allocation2 + $0xe0] sm:$0xff]
    %v104 = vld [vmem:[#allocation2 + $0xe8] sm:$0xff]
    %v105 = vld [vmem:[#allocation2 + $0xf0] sm:$0xff]
    %v106 = vld [vmem:[#allocation2 + $0xf8] sm:$0xff]
    %v107 = vld [vmem:[%s2] sm:$0xf]
    %v109 = vperm.slane %v107, 0
    %v110 = vperm.slane %v107, 1
    %v111 = vperm.slane %v107, 2
    %v112 = vperm.slane %v107, 3
    %v119 = vunpack.c.l.b16 %v73
    %v120 = vunpack.c.l.b16 %v74
    %v121 = vpack.c.b16 %v120, %v119
    %v155 = vunpack.c.l.b16 %v75
    %v156 = vunpack.c.h.b16 %v75
    %v157 = vunpack.c.l.b16 %v76
    %v158 = vunpack.c.h.b16 %v76
    %v159 = vunpack.c.l.b16 %v77
    %v160 = vunpack.c.h.b16 %v77
    %v161 = vunpack.c.l.b16 %v78
    %v162 = vunpack.c.h.b16 %v78
    %v163 = vunpack.c.l.b16 %v79
    %v164 = vunpack.c.h.b16 %v79
    %v165 = vunpack.c.l.b16 %v80
    %v166 = vunpack.c.h.b16 %v80
    %v167 = vunpack.c.l.b16 %v81
    %v168 = vunpack.c.h.b16 %v81
    %v169 = vunpack.c.l.b16 %v82
    %v170 = vunpack.c.h.b16 %v82
    %v171 = vunpack.c.l.b16 %v83
    %v172 = vunpack.c.h.b16 %v83
    %v173 = vunpack.c.l.b16 %v84
    %v174 = vunpack.c.h.b16 %v84
    %v175 = vunpack.c.l.b16 %v85
    %v176 = vunpack.c.h.b16 %v85
    %v177 = vunpack.c.l.b16 %v86
    %v178 = vunpack.c.h.b16 %v86
    %v179 = vunpack.c.l.b16 %v87
    %v180 = vunpack.c.h.b16 %v87
    %v181 = vunpack.c.l.b16 %v88
    %v182 = vunpack.c.h.b16 %v88
    %v183 = vunpack.c.l.b16 %v89
    %v184 = vunpack.c.h.b16 %v89
    %v185 = vunpack.c.l.b16 %v90
    %v186 = vunpack.c.h.b16 %v90
    %v187 = vunpack.c.l.b16 %v91
    %v188 = vunpack.c.h.b16 %v91
    %v189 = vunpack.c.l.b16 %v92
    %v190 = vunpack.c.h.b16 %v92
    %v191 = vunpack.c.l.b16 %v93
    %v192 = vunpack.c.h.b16 %v93
    %v193 = vunpack.c.l.b16 %v94
    %v194 = vunpack.c.h.b16 %v94
    %v195 = vunpack.c.l.b16 %v95
    %v196 = vunpack.c.h.b16 %v95
    %v197 = vunpack.c.l.b16 %v96
    %v198 = vunpack.c.h.b16 %v96
    %v199 = vunpack.c.l.b16 %v97
    %v200 = vunpack.c.h.b16 %v97
    %v201 = vunpack.c.l.b16 %v98
    %v202 = vunpack.c.h.b16 %v98
    %v203 = vunpack.c.l.b16 %v99
    %v204 = vunpack.c.h.b16 %v99
    %v205 = vunpack.c.l.b16 %v100
    %v206 = vunpack.c.h.b16 %v100
    %v207 = vunpack.c.l.b16 %v101
    %v208 = vunpack.c.h.b16 %v101
    %v209 = vunpack.c.l.b16 %v102
    %v210 = vunpack.c.h.b16 %v102
    %v211 = vunpack.c.l.b16 %v103
    %v212 = vunpack.c.h.b16 %v103
    %v213 = vunpack.c.l.b16 %v104
    %v214 = vunpack.c.h.b16 %v104
    %v215 = vunpack.c.l.b16 %v105
    %v216 = vunpack.c.h.b16 %v105
    %v217 = vunpack.c.l.b16 %v106
    %v218 = vunpack.c.h.b16 %v106
    %v219 = vpack.c.b16 %v159, %v155
    %v220 = vpack.c.b16 %v160, %v156
    %v221 = vpack.c.b16 %v161, %v157
    %v222 = vpack.c.b16 %v162, %v158
    %v223 = vpack.c.b16 %v167, %v163
    %v224 = vpack.c.b16 %v168, %v164
    %v225 = vpack.c.b16 %v169, %v165
    %v226 = vpack.c.b16 %v170, %v166
    %v227 = vpack.c.b16 %v175, %v171
    %v228 = vpack.c.b16 %v176, %v172
    %v229 = vpack.c.b16 %v177, %v173
    %v230 = vpack.c.b16 %v178, %v174
    %v231 = vpack.c.b16 %v183, %v179
    %v232 = vpack.c.b16 %v184, %v180
    %v233 = vpack.c.b16 %v185, %v181
    %v234 = vpack.c.b16 %v186, %v182
    %v235 = vpack.c.b16 %v191, %v187
    %v236 = vpack.c.b16 %v192, %v188
    %v237 = vpack.c.b16 %v193, %v189
    %v238 = vpack.c.b16 %v194, %v190
    %v239 = vpack.c.b16 %v199, %v195
    %v240 = vpack.c.b16 %v200, %v196
    %v241 = vpack.c.b16 %v201, %v197
    %v242 = vpack.c.b16 %v202, %v198
    %v243 = vpack.c.b16 %v207, %v203
    %v244 = vpack.c.b16 %v208, %v204
    %v245 = vpack.c.b16 %v209, %v205
    %v246 = vpack.c.b16 %v210, %v206
    %v247 = vpack.c.b16 %v215, %v211
    %v248 = vpack.c.b16 %v216, %v212
    %v249 = vpack.c.b16 %v217, %v213
    %v250 = vpack.c.b16 %v218, %v214
    %283 = vmatpush.bf16.msra.mxu0 %v247
    %284 = vmatpush.bf16.msra.mxu0 %v243
    %285 = vmatpush.bf16.msra.mxu0 %v239
    %286 = vmatpush.bf16.msra.mxu0 %v235
    %287 = vmatpush.bf16.msra.mxu0 %v231
    %288 = vmatpush.bf16.msra.mxu0 %v227
    %289 = vmatpush.bf16.msra.mxu0 %v223
    %290 = vmatpush.bf16.msra.mxu0 %v219
    %291 = vmatmul.bf16.gmra.mxu0 %v121
    %v292 = vpop.f32.mrf.mxu0
    %v293 = vadd.f32 %v109, %v292
    %v294 = vpop.f32.mrf.mxu0
    %v295 = vadd.f32 %v109, %v294
    %296 = vdwg.mxu0
    %297 = vmatpush.bf16.msra.mxu0 %v248
    %298 = vmatpush.bf16.msra.mxu0 %v244
    %299 = vmatpush.bf16.msra.mxu0 %v240
    %300 = vmatpush.bf16.msra.mxu0 %v236
    %301 = vmatpush.bf16.msra.mxu0 %v232
    %302 = vmatpush.bf16.msra.mxu0 %v228
    %303 = vmatpush.bf16.msra.mxu0 %v224
    %304 = vmatpush.bf16.msra.mxu0 %v220
    %305 = vmatmul.bf16.gmra.mxu0 %v121
    %v306 = vpop.f32.mrf.mxu0
    %v307 = vadd.f32 %v110, %v306
    %v308 = vpop.f32.mrf.mxu0
    %v309 = vadd.f32 %v110, %v308
    %310 = vdwg.mxu0
    %311 = vmatpush.bf16.msra.mxu0 %v249
    %312 = vmatpush.bf16.msra.mxu0 %v245
    %313 = vmatpush.bf16.msra.mxu0 %v241
    %314 = vmatpush.bf16.msra.mxu0 %v237
    %315 = vmatpush.bf16.msra.mxu0 %v233
    %316 = vmatpush.bf16.msra.mxu0 %v229
    %317 = vmatpush.bf16.msra.mxu0 %v225
    %318 = vmatpush.bf16.msra.mxu0 %v221
    %319 = vmatmul.bf16.gmra.mxu0 %v121
    %v320 = vpop.f32.mrf.mxu0
    %v321 = vadd.f32 %v111, %v320
    %v322 = vpop.f32.mrf.mxu0
    %v323 = vadd.f32 %v111, %v322
    %324 = vdwg.mxu0
    %325 = vmatpush.bf16.msra.mxu0 %v250
    %326 = vmatpush.bf16.msra.mxu0 %v246
    %327 = vmatpush.bf16.msra.mxu0 %v242
    %328 = vmatpush.bf16.msra.mxu0 %v238
    %329 = vmatpush.bf16.msra.mxu0 %v234
    %330 = vmatpush.bf16.msra.mxu0 %v230
    %331 = vmatpush.bf16.msra.mxu0 %v226
    %332 = vmatpush.bf16.msra.mxu0 %v222
    %333 = vmatmul.bf16.gmra.mxu0 %v121
    %v334 = vpop.f32.mrf.mxu0
    %v335 = vadd.f32 %v112, %v334
    %v336 = vpop.f32.mrf.mxu0
    %v337 = vadd.f32 %v112, %v336
    %338 = vdwg.mxu0
    %v339 = vmax.f32 %v293, 0.0
    %v340 = vmax.f32 %v307, 0.0
    %v341 = vmax.f32 %v321, 0.0
    %v342 = vmax.f32 %v335, 0.0
    %v343 = vmax.f32 %v295, 0.0
    %v344 = vmax.f32 %v309, 0.0
    %v345 = vmax.f32 %v323, 0.0
    %v346 = vmax.f32 %v337, 0.0
    %v347 = vpack.c.bf16 %v343, %v339
    %v348 = vpack.c.bf16 %v344, %v340
    %v349 = vpack.c.bf16 %v345, %v341
    %v350 = vpack.c.bf16 %v346, %v342
    %v351 = vld [vmem:[#allocation4] sm:$0xff]
    %v352 = vld [vmem:[#allocation4 + $0x8] sm:$0xff]
    %v353 = vld [vmem:[#allocation4 + $0x10] sm:$0xff]
    %v354 = vld [vmem:[#allocation4 + $0x18] sm:$0xff]
    %v355 = vld [vmem:[#allocation4 + $0x20] sm:$0xff]
    %v356 = vld [vmem:[#allocation4 + $0x28] sm:$0xff]
    %v357 = vld [vmem:[#allocation4 + $0x30] sm:$0xff]
    %v358 = vld [vmem:[#allocation4 + $0x38] sm:$0xff]
    %v359 = vld [vmem:[#allocation4 + $0x40] sm:$0xff]
    %v360 = vld [vmem:[#allocation4 + $0x48] sm:$0xff]
    %v361 = vld [vmem:[#allocation4 + $0x50] sm:$0xff]
    %v362 = vld [vmem:[#allocation4 + $0x58] sm:$0xff]
    %v363 = vld [vmem:[#allocation4 + $0x60] sm:$0xff]
    %v364 = vld [vmem:[#allocation4 + $0x68] sm:$0xff]
    %v365 = vld [vmem:[#allocation4 + $0x70] sm:$0xff]
    %v366 = vld [vmem:[#allocation4 + $0x78] sm:$0xff]
    %v367 = vld [vmem:[#allocation4 + $0x80] sm:$0xff]
    %v368 = vld [vmem:[#allocation4 + $0x88] sm:$0xff]
    %v369 = vld [vmem:[#allocation4 + $0x90] sm:$0xff]
    %v370 = vld [vmem:[#allocation4 + $0x98] sm:$0xff]
    %v371 = vld [vmem:[#allocation4 + $0xa0] sm:$0xff]
    %v372 = vld [vmem:[#allocation4 + $0xa8] sm:$0xff]
    %v373 = vld [vmem:[#allocation4 + $0xb0] sm:$0xff]
    %v374 = vld [vmem:[#allocation4 + $0xb8] sm:$0xff]
    %v375 = vld [vmem:[#allocation4 + $0xc0] sm:$0xff]
    %v376 = vld [vmem:[#allocation4 + $0xc8] sm:$0xff]
    %v377 = vld [vmem:[#allocation4 + $0xd0] sm:$0xff]
    %v378 = vld [vmem:[#allocation4 + $0xd8] sm:$0xff]
    %v379 = vld [vmem:[#allocation4 + $0xe0] sm:$0xff]
    %v380 = vld [vmem:[#allocation4 + $0xe8] sm:$0xff]
    %v381 = vld [vmem:[#allocation4 + $0xf0] sm:$0xff]
    %v382 = vld [vmem:[#allocation4 + $0xf8] sm:$0xff]
    %v383 = vld [vmem:[#allocation4 + $0x100] sm:$0xff]
    %v384 = vld [vmem:[#allocation4 + $0x108] sm:$0xff]
    %v385 = vld [vmem:[#allocation4 + $0x110] sm:$0xff]
    %v386 = vld [vmem:[#allocation4 + $0x118] sm:$0xff]
    %v387 = vld [vmem:[#allocation4 + $0x120] sm:$0xff]
    %v388 = vld [vmem:[#allocation4 + $0x128] sm:$0xff]
    %v389 = vld [vmem:[#allocation4 + $0x130] sm:$0xff]
    %v390 = vld [vmem:[#allocation4 + $0x138] sm:$0xff]
    %v391 = vld [vmem:[#allocation4 + $0x140] sm:$0xff]
    %v392 = vld [vmem:[#allocation4 + $0x148] sm:$0xff]
    %v393 = vld [vmem:[#allocation4 + $0x150] sm:$0xff]
    %v394 = vld [vmem:[#allocation4 + $0x158] sm:$0xff]
    %v395 = vld [vmem:[#allocation4 + $0x160] sm:$0xff]
    %v396 = vld [vmem:[#allocation4 + $0x168] sm:$0xff]
    %v397 = vld [vmem:[#allocation4 + $0x170] sm:$0xff]
    %v398 = vld [vmem:[#allocation4 + $0x178] sm:$0xff]
    %v399 = vld [vmem:[#allocation4 + $0x180] sm:$0xff]
    %v400 = vld [vmem:[#allocation4 + $0x188] sm:$0xff]
    %v401 = vld [vmem:[#allocation4 + $0x190] sm:$0xff]
    %v402 = vld [vmem:[#allocation4 + $0x198] sm:$0xff]
    %v403 = vld [vmem:[#allocation4 + $0x1a0] sm:$0xff]
    %v404 = vld [vmem:[#allocation4 + $0x1a8] sm:$0xff]
    %v405 = vld [vmem:[#allocation4 + $0x1b0] sm:$0xff]
    %v406 = vld [vmem:[#allocation4 + $0x1b8] sm:$0xff]
    %v407 = vld [vmem:[#allocation4 + $0x1c0] sm:$0xff]
    %v408 = vld [vmem:[#allocation4 + $0x1c8] sm:$0xff]
    %v409 = vld [vmem:[#allocation4 + $0x1d0] sm:$0xff]
    %v410 = vld [vmem:[#allocation4 + $0x1d8] sm:$0xff]
    %v411 = vld [vmem:[#allocation4 + $0x1e0] sm:$0xff]
    %v412 = vld [vmem:[#allocation4 + $0x1e8] sm:$0xff]
    %v413 = vld [vmem:[#allocation4 + $0x1f0] sm:$0xff]
    %v414 = vld [vmem:[#allocation4 + $0x1f8] sm:$0xff]
    %v415 = vld [vmem:[%s4] sm:$0x3]
    %v417 = vperm.slane %v415, 0
    %v418 = vperm.slane %v415, 1
    %v485 = vunpack.c.l.b16 %v351
    %v486 = vunpack.c.h.b16 %v351
    %v487 = vunpack.c.l.b16 %v352
    %v488 = vunpack.c.h.b16 %v352
    %v489 = vunpack.c.l.b16 %v353
    %v490 = vunpack.c.h.b16 %v353
    %v491 = vunpack.c.l.b16 %v354
    %v492 = vunpack.c.h.b16 %v354
    %v493 = vunpack.c.l.b16 %v355
    %v494 = vunpack.c.h.b16 %v355
    %v495 = vunpack.c.l.b16 %v356
    %v496 = vunpack.c.h.b16 %v356
    %v497 = vunpack.c.l.b16 %v357
    %v498 = vunpack.c.h.b16 %v357
    %v499 = vunpack.c.l.b16 %v358
    %v500 = vunpack.c.h.b16 %v358
    %v501 = vunpack.c.l.b16 %v359
    %v502 = vunpack.c.h.b16 %v359
    %v503 = vunpack.c.l.b16 %v360
    %v504 = vunpack.c.h.b16 %v360
    %v505 = vunpack.c.l.b16 %v361
    %v506 = vunpack.c.h.b16 %v361
    %v507 = vunpack.c.l.b16 %v362
    %v508 = vunpack.c.h.b16 %v362
    %v509 = vunpack.c.l.b16 %v363
    %v510 = vunpack.c.h.b16 %v363
    %v511 = vunpack.c.l.b16 %v364
    %v512 = vunpack.c.h.b16 %v364
    %v513 = vunpack.c.l.b16 %v365
    %v514 = vunpack.c.h.b16 %v365
    %v515 = vunpack.c.l.b16 %v366
    %v516 = vunpack.c.h.b16 %v366
    %v517 = vunpack.c.l.b16 %v367
    %v518 = vunpack.c.h.b16 %v367
    %v519 = vunpack.c.l.b16 %v368
    %v520 = vunpack.c.h.b16 %v368
    %v521 = vunpack.c.l.b16 %v369
    %v522 = vunpack.c.h.b16 %v369
    %v523 = vunpack.c.l.b16 %v370
    %v524 = vunpack.c.h.b16 %v370
    %v525 = vunpack.c.l.b16 %v371
    %v526 = vunpack.c.h.b16 %v371
    %v527 = vunpack.c.l.b16 %v372
    %v528 = vunpack.c.h.b16 %v372
    %v529 = vunpack.c.l.b16 %v373
    %v530 = vunpack.c.h.b16 %v373
    %v531 = vunpack.c.l.b16 %v374
    %v532 = vunpack.c.h.b16 %v374
    %v533 = vunpack.c.l.b16 %v375
    %v534 = vunpack.c.h.b16 %v375
    %v535 = vunpack.c.l.b16 %v376
    %v536 = vunpack.c.h.b16 %v376
    %v537 = vunpack.c.l.b16 %v377
    %v538 = vunpack.c.h.b16 %v377
    %v539 = vunpack.c.l.b16 %v378
    %v540 = vunpack.c.h.b16 %v378
    %v541 = vunpack.c.l.b16 %v379
    %v542 = vunpack.c.h.b16 %v379
    %v543 = vunpack.c.l.b16 %v380
    %v544 = vunpack.c.h.b16 %v380
    %v545 = vunpack.c.l.b16 %v381
    %v546 = vunpack.c.h.b16 %v381
    %v547 = vunpack.c.l.b16 %v382
    %v548 = vunpack.c.h.b16 %v382
    %v549 = vunpack.c.l.b16 %v383
    %v550 = vunpack.c.h.b16 %v383
    %v551 = vunpack.c.l.b16 %v384
    %v552 = vunpack.c.h.b16 %v384
    %v553 = vunpack.c.l.b16 %v385
    %v554 = vunpack.c.h.b16 %v385
    %v555 = vunpack.c.l.b16 %v386
    %v556 = vunpack.c.h.b16 %v386
    %v557 = vunpack.c.l.b16 %v387
    %v558 = vunpack.c.h.b16 %v387
    %v559 = vunpack.c.l.b16 %v388
    %v560 = vunpack.c.h.b16 %v388
    %v561 = vunpack.c.l.b16 %v389
    %v562 = vunpack.c.h.b16 %v389
    %v563 = vunpack.c.l.b16 %v390
    %v564 = vunpack.c.h.b16 %v390
    %v565 = vunpack.c.l.b16 %v391
    %v566 = vunpack.c.h.b16 %v391
    %v567 = vunpack.c.l.b16 %v392
    %v568 = vunpack.c.h.b16 %v392
    %v569 = vunpack.c.l.b16 %v393
    %v570 = vunpack.c.h.b16 %v393
    %v571 = vunpack.c.l.b16 %v394
    %v572 = vunpack.c.h.b16 %v394
    %v573 = vunpack.c.l.b16 %v395
    %v574 = vunpack.c.h.b16 %v395
    %v575 = vunpack.c.l.b16 %v396
    %v576 = vunpack.c.h.b16 %v396
    %v577 = vunpack.c.l.b16 %v397
    %v578 = vunpack.c.h.b16 %v397
    %v579 = vunpack.c.l.b16 %v398
    %v580 = vunpack.c.h.b16 %v398
    %v581 = vunpack.c.l.b16 %v399
    %v582 = vunpack.c.h.b16 %v399
    %v583 = vunpack.c.l.b16 %v400
    %v584 = vunpack.c.h.b16 %v400
    %v585 = vunpack.c.l.b16 %v401
    %v586 = vunpack.c.h.b16 %v401
    %v587 = vunpack.c.l.b16 %v402
    %v588 = vunpack.c.h.b16 %v402
    %v589 = vunpack.c.l.b16 %v403
    %v590 = vunpack.c.h.b16 %v403
    %v591 = vunpack.c.l.b16 %v404
    %v592 = vunpack.c.h.b16 %v404
    %v593 = vunpack.c.l.b16 %v405
    %v594 = vunpack.c.h.b16 %v405
    %v595 = vunpack.c.l.b16 %v406
    %v596 = vunpack.c.h.b16 %v406
    %v597 = vunpack.c.l.b16 %v407
    %v598 = vunpack.c.h.b16 %v407
    %v599 = vunpack.c.l.b16 %v408
    %v600 = vunpack.c.h.b16 %v408
    %v601 = vunpack.c.l.b16 %v409
    %v602 = vunpack.c.h.b16 %v409
    %v603 = vunpack.c.l.b16 %v410
    %v604 = vunpack.c.h.b16 %v410
    %v605 = vunpack.c.l.b16 %v411
    %v606 = vunpack.c.h.b16 %v411
    %v607 = vunpack.c.l.b16 %v412
    %v608 = vunpack.c.h.b16 %v412
    %v609 = vunpack.c.l.b16 %v413
    %v610 = vunpack.c.h.b16 %v413
    %v611 = vunpack.c.l.b16 %v414
    %v612 = vunpack.c.h.b16 %v414
    %v613 = vpack.c.b16 %v487, %v485
    %v614 = vpack.c.b16 %v488, %v486
    %v615 = vpack.c.b16 %v491, %v489
    %v616 = vpack.c.b16 %v492, %v490
    %v617 = vpack.c.b16 %v495, %v493
    %v618 = vpack.c.b16 %v496, %v494
    %v619 = vpack.c.b16 %v499, %v497
    %v620 = vpack.c.b16 %v500, %v498
    %v621 = vpack.c.b16 %v503, %v501
    %v622 = vpack.c.b16 %v504, %v502
    %v623 = vpack.c.b16 %v507, %v505
    %v624 = vpack.c.b16 %v508, %v506
    %v625 = vpack.c.b16 %v511, %v509
    %v626 = vpack.c.b16 %v512, %v510
    %v627 = vpack.c.b16 %v515, %v513
    %v628 = vpack.c.b16 %v516, %v514
    %v629 = vpack.c.b16 %v519, %v517
    %v630 = vpack.c.b16 %v520, %v518
    %v631 = vpack.c.b16 %v523, %v521
    %v632 = vpack.c.b16 %v524, %v522
    %v633 = vpack.c.b16 %v527, %v525
    %v634 = vpack.c.b16 %v528, %v526
    %v635 = vpack.c.b16 %v531, %v529
    %v636 = vpack.c.b16 %v532, %v530
    %v637 = vpack.c.b16 %v535, %v533
    %v638 = vpack.c.b16 %v536, %v534
    %v639 = vpack.c.b16 %v539, %v537
    %v640 = vpack.c.b16 %v540, %v538
    %v641 = vpack.c.b16 %v543, %v541
    %v642 = vpack.c.b16 %v544, %v542
    %v643 = vpack.c.b16 %v547, %v545
    %v644 = vpack.c.b16 %v548, %v546
    %v645 = vpack.c.b16 %v551, %v549
    %v646 = vpack.c.b16 %v552, %v550
    %v647 = vpack.c.b16 %v555, %v553
    %v648 = vpack.c.b16 %v556, %v554
    %v649 = vpack.c.b16 %v559, %v557
    %v650 = vpack.c.b16 %v560, %v558
    %v651 = vpack.c.b16 %v563, %v561
    %v652 = vpack.c.b16 %v564, %v562
    %v653 = vpack.c.b16 %v567, %v565
    %v654 = vpack.c.b16 %v568, %v566
    %v655 = vpack.c.b16 %v571, %v569
    %v656 = vpack.c.b16 %v572, %v570
    %v657 = vpack.c.b16 %v575, %v573
    %v658 = vpack.c.b16 %v576, %v574
    %v659 = vpack.c.b16 %v579, %v577
    %v660 = vpack.c.b16 %v580, %v578
    %v661 = vpack.c.b16 %v583, %v581
    %v662 = vpack.c.b16 %v584, %v582
    %v663 = vpack.c.b16 %v587, %v585
    %v664 = vpack.c.b16 %v588, %v586
    %v665 = vpack.c.b16 %v591, %v589
    %v666 = vpack.c.b16 %v592, %v590
    %v667 = vpack.c.b16 %v595, %v593
    %v668 = vpack.c.b16 %v596, %v594
    %v669 = vpack.c.b16 %v599, %v597
    %v670 = vpack.c.b16 %v600, %v598
    %v671 = vpack.c.b16 %v603, %v601
    %v672 = vpack.c.b16 %v604, %v602
    %v673 = vpack.c.b16 %v607, %v605
    %v674 = vpack.c.b16 %v608, %v606
    %v675 = vpack.c.b16 %v611, %v609
    %v676 = vpack.c.b16 %v612, %v610
    %741 = vmatpush.bf16.msra.mxu0 %v627
    %742 = vmatpush.bf16.msra.mxu0 %v625
    %743 = vmatpush.bf16.msra.mxu0 %v623
    %744 = vmatpush.bf16.msra.mxu0 %v621
    %745 = vmatpush.bf16.msra.mxu0 %v619
    %746 = vmatpush.bf16.msra.mxu0 %v617
    %747 = vmatpush.bf16.msra.mxu0 %v615
    %748 = vmatpush.bf16.msra.mxu0 %v613
    %749 = vmatmul.bf16.gmra.mxu0 %v347
    %v750 = vpop.f32.mrf.mxu0
    %v751 = vadd.f32 %v417, %v750
    %v752 = vpop.f32.mrf.mxu0
    %v753 = vadd.f32 %v417, %v752
    %754 = vdwg.mxu0
    %755 = vmatpush.bf16.msra.mxu0 %v643
    %756 = vmatpush.bf16.msra.mxu0 %v641
    %757 = vmatpush.bf16.msra.mxu0 %v639
    %758 = vmatpush.bf16.msra.mxu0 %v637
    %759 = vmatpush.bf16.msra.mxu0 %v635
    %760 = vmatpush.bf16.msra.mxu0 %v633
    %761 = vmatpush.bf16.msra.mxu0 %v631
    %762 = vmatpush.bf16.msra.mxu0 %v629
    %763 = vmatmul.bf16.gmra.mxu0 %v348
    %v764 = vpop.f32.mrf.mxu0
    %v765 = vadd.f32 %v751, %v764
    %v766 = vpop.f32.mrf.mxu0
    %v767 = vadd.f32 %v753, %v766
    %768 = vdwg.mxu0
    %769 = vmatpush.bf16.msra.mxu0 %v659
    %770 = vmatpush.bf16.msra.mxu0 %v657
    %771 = vmatpush.bf16.msra.mxu0 %v655
    %772 = vmatpush.bf16.msra.mxu0 %v653
    %773 = vmatpush.bf16.msra.mxu0 %v651
    %774 = vmatpush.bf16.msra.mxu0 %v649
    %775 = vmatpush.bf16.msra.mxu0 %v647
    %776 = vmatpush.bf16.msra.mxu0 %v645
    %777 = vmatmul.bf16.gmra.mxu0 %v349
    %v778 = vpop.f32.mrf.mxu0
    %v779 = vadd.f32 %v765, %v778
    %v780 = vpop.f32.mrf.mxu0
    %v781 = vadd.f32 %v767, %v780
    %782 = vdwg.mxu0
    %783 = vmatpush.bf16.msra.mxu0 %v675
    %784 = vmatpush.bf16.msra.mxu0 %v673
    %785 = vmatpush.bf16.msra.mxu0 %v671
    %786 = vmatpush.bf16.msra.mxu0 %v669
    %787 = vmatpush.bf16.msra.mxu0 %v667
    %788 = vmatpush.bf16.msra.mxu0 %v665
    %789 = vmatpush.bf16.msra.mxu0 %v663
    %790 = vmatpush.bf16.msra.mxu0 %v661
    %791 = vmatmul.bf16.gmra.mxu0 %v350
    %v792 = vpop.f32.mrf.mxu0
    %v793 = vadd.f32 %v779, %v792
    %v794 = vpop.f32.mrf.mxu0
    %v795 = vadd.f32 %v781, %v794
    %796 = vdwg.mxu0
    %797 = vmatpush.bf16.msra.mxu0 %v628
    %798 = vmatpush.bf16.msra.mxu0 %v626
    %799 = vmatpush.bf16.msra.mxu0 %v624
    %800 = vmatpush.bf16.msra.mxu0 %v622
    %801 = vmatpush.bf16.msra.mxu0 %v620
    %802 = vmatpush.bf16.msra.mxu0 %v618
    %803 = vmatpush.bf16.msra.mxu0 %v616
    %804 = vmatpush.bf16.msra.mxu0 %v614
    %805 = vmatmul.bf16.gmra.mxu0 %v347
    %v806 = vpop.f32.mrf.mxu0
    %v807 = vadd.f32 %v418, %v806
    %v808 = vpop.f32.mrf.mxu0
    %v809 = vadd.f32 %v418, %v808
    %810 = vdwg.mxu0
    %811 = vmatpush.bf16.msra.mxu0 %v644
    %812 = vmatpush.bf16.msra.mxu0 %v642
    %813 = vmatpush.bf16.msra.mxu0 %v640
    %814 = vmatpush.bf16.msra.mxu0 %v638
    %815 = vmatpush.bf16.msra.mxu0 %v636
    %816 = vmatpush.bf16.msra.mxu0 %v634
    %817 = vmatpush.bf16.msra.mxu0 %v632
    %818 = vmatpush.bf16.msra.mxu0 %v630
    %819 = vmatmul.bf16.gmra.mxu0 %v348
    %v820 = vpop.f32.mrf.mxu0
    %v821 = vadd.f32 %v807, %v820
    %v822 = vpop.f32.mrf.mxu0
    %v823 = vadd.f32 %v809, %v822
    %824 = vdwg.mxu0
    %825 = vmatpush.bf16.msra.mxu0 %v660
    %826 = vmatpush.bf16.msra.mxu0 %v658
    %827 = vmatpush.bf16.msra.mxu0 %v656
    %828 = vmatpush.bf16.msra.mxu0 %v654
    %829 = vmatpush.bf16.msra.mxu0 %v652
    %830 = vmatpush.bf16.msra.mxu0 %v650
    %831 = vmatpush.bf16.msra.mxu0 %v648
    %832 = vmatpush.bf16.msra.mxu0 %v646
    %833 = vmatmul.bf16.gmra.mxu0 %v349
    %v834 = vpop.f32.mrf.mxu0
    %v835 = vadd.f32 %v821, %v834
    %v836 = vpop.f32.mrf.mxu0
    %v837 = vadd.f32 %v823, %v836
    %838 = vdwg.mxu0
    %839 = vmatpush.bf16.msra.mxu0 %v676
    %840 = vmatpush.bf16.msra.mxu0 %v674
    %841 = vmatpush.bf16.msra.mxu0 %v672
    %842 = vmatpush.bf16.msra.mxu0 %v670
    %843 = vmatpush.bf16.msra.mxu0 %v668
    %844 = vmatpush.bf16.msra.mxu0 %v666
    %845 = vmatpush.bf16.msra.mxu0 %v664
    %846 = vmatpush.bf16.msra.mxu0 %v662
    %847 = vmatmul.bf16.gmra.mxu0 %v350
    %v848 = vpop.f32.mrf.mxu0
    %v849 = vadd.f32 %v835, %v848
    %v850 = vpop.f32.mrf.mxu0
    %v851 = vadd.f32 %v837, %v850
    %852 = vdwg.mxu0
    %v853 = vmax.f32 %v793, 0.0
    %v854 = vmax.f32 %v849, 0.0
    %v855 = vmax.f32 %v795, 0.0
    %v856 = vmax.f32 %v851, 0.0
    %v857 = vpack.c.bf16 %v855, %v853
    %v858 = vpack.c.bf16 %v856, %v854
    %v859 = vld [vmem:[#allocation6] sm:$0xf]
    %v860 = vld [vmem:[#allocation6 + $0x4] sm:$0xf]
    %v861 = vld [vmem:[#allocation6 + $0x8] sm:$0xf]
    %v862 = vld [vmem:[#allocation6 + $0xc] sm:$0xf]
    %v863 = vld [vmem:[#allocation6 + $0x10] sm:$0xf]
    %v864 = vld [vmem:[#allocation6 + $0x14] sm:$0xf]
    %v865 = vld [vmem:[#allocation6 + $0x18] sm:$0xf]
    %v866 = vld [vmem:[#allocation6 + $0x1c] sm:$0xf]
    %v867 = vld [vmem:[#allocation6 + $0x20] sm:$0xf]
    %v868 = vld [vmem:[#allocation6 + $0x24] sm:$0xf]
    %v869 = vld [vmem:[#allocation6 + $0x28] sm:$0xf]
    %v870 = vld [vmem:[#allocation6 + $0x2c] sm:$0xf]
    %v871 = vld [vmem:[#allocation6 + $0x30] sm:$0xf]
    %v872 = vld [vmem:[#allocation6 + $0x34] sm:$0xf]
    %v873 = vld [vmem:[#allocation6 + $0x38] sm:$0xf]
    %v874 = vld [vmem:[#allocation6 + $0x3c] sm:$0xf]
    %v875 = vld [vmem:[#allocation6 + $0x40] sm:$0xf]
    %v876 = vld [vmem:[#allocation6 + $0x44] sm:$0xf]
    %v877 = vld [vmem:[#allocation6 + $0x48] sm:$0xf]
    %v878 = vld [vmem:[#allocation6 + $0x4c] sm:$0xf]
    %v879 = vld [vmem:[#allocation6 + $0x50] sm:$0xf]
    %v880 = vld [vmem:[#allocation6 + $0x54] sm:$0xf]
    %v881 = vld [vmem:[#allocation6 + $0x58] sm:$0xf]
    %v882 = vld [vmem:[#allocation6 + $0x5c] sm:$0xf]
    %v883 = vld [vmem:[#allocation6 + $0x60] sm:$0xf]
    %v884 = vld [vmem:[#allocation6 + $0x64] sm:$0xf]
    %v885 = vld [vmem:[#allocation6 + $0x68] sm:$0xf]
    %v886 = vld [vmem:[#allocation6 + $0x6c] sm:$0xf]
    %v887 = vld [vmem:[#allocation6 + $0x70] sm:$0xf]
    %v888 = vld [vmem:[#allocation6 + $0x74] sm:$0xf]
    %v889 = vld [vmem:[#allocation6 + $0x78] sm:$0xf]
    %v890 = vld [vmem:[#allocation6 + $0x7c] sm:$0xf]
    %v891 = vld [vmem:[%s6] sm:$0x1]
    %v893 = vperm.slane %v891, 0
    %v927 = vunpack.c.l.b16 %v859
    %v928 = vunpack.c.l.b16 %v860
    %v929 = vunpack.c.l.b16 %v861
    %v930 = vunpack.c.l.b16 %v862
    %v931 = vunpack.c.l.b16 %v863
    %v932 = vunpack.c.l.b16 %v864
    %v933 = vunpack.c.l.b16 %v865
    %v934 = vunpack.c.l.b16 %v866
    %v935 = vunpack.c.l.b16 %v867
    %v936 = vunpack.c.l.b16 %v868
    %v937 = vunpack.c.l.b16 %v869
    %v938 = vunpack.c.l.b16 %v870
    %v939 = vunpack.c.l.b16 %v871
    %v940 = vunpack.c.l.b16 %v872
    %v941 = vunpack.c.l.b16 %v873
    %v942 = vunpack.c.l.b16 %v874
    %v943 = vunpack.c.l.b16 %v875
    %v944 = vunpack.c.l.b16 %v876
    %v945 = vunpack.c.l.b16 %v877
    %v946 = vunpack.c.l.b16 %v878
    %v947 = vunpack.c.l.b16 %v879
    %v948 = vunpack.c.l.b16 %v880
    %v949 = vunpack.c.l.b16 %v881
    %v950 = vunpack.c.l.b16 %v882
    %v951 = vunpack.c.l.b16 %v883
    %v952 = vunpack.c.l.b16 %v884
    %v953 = vunpack.c.l.b16 %v885
    %v954 = vunpack.c.l.b16 %v886
    %v955 = vunpack.c.l.b16 %v887
    %v956 = vunpack.c.l.b16 %v888
    %v957 = vunpack.c.l.b16 %v889
    %v958 = vunpack.c.l.b16 %v890
    %v959 = vpack.c.b16 %v928, %v927
    %v960 = vpack.c.b16 %v930, %v929
    %v961 = vpack.c.b16 %v932, %v931
    %v962 = vpack.c.b16 %v934, %v933
    %v963 = vpack.c.b16 %v936, %v935
    %v964 = vpack.c.b16 %v938, %v937
    %v965 = vpack.c.b16 %v940, %v939
    %v966 = vpack.c.b16 %v942, %v941
    %v967 = vpack.c.b16 %v944, %v943
    %v968 = vpack.c.b16 %v946, %v945
    %v969 = vpack.c.b16 %v948, %v947
    %v970 = vpack.c.b16 %v950, %v949
    %v971 = vpack.c.b16 %v952, %v951
    %v972 = vpack.c.b16 %v954, %v953
    %v973 = vpack.c.b16 %v956, %v955
    %v974 = vpack.c.b16 %v958, %v957
    %991 = vmatpush.bf16.msra.mxu0 %v966
    %992 = vmatpush.bf16.msra.mxu0 %v965
    %993 = vmatpush.bf16.msra.mxu0 %v964
    %994 = vmatpush.bf16.msra.mxu0 %v963
    %995 = vmatpush.bf16.msra.mxu0 %v962
    %996 = vmatpush.bf16.msra.mxu0 %v961
    %997 = vmatpush.bf16.msra.mxu0 %v960
    %998 = vmatpush.bf16.msra.mxu0 %v959
    %999 = vmatmul.bf16.gmra.mxu0 %v857
    %v1000 = vpop.f32.mrf.mxu0
    %v1001 = vadd.f32 %v893, %v1000
    %v1002 = vpop.f32.mrf.mxu0
    %v1003 = vadd.f32 %v893, %v1002
    %1004 = vdwg.mxu0
    %1005 = vmatpush.bf16.msra.mxu0 %v974
    %1006 = vmatpush.bf16.msra.mxu0 %v973
    %1007 = vmatpush.bf16.msra.mxu0 %v972
    %1008 = vmatpush.bf16.msra.mxu0 %v971
    %1009 = vmatpush.bf16.msra.mxu0 %v970
    %1010 = vmatpush.bf16.msra.mxu0 %v969
    %1011 = vmatpush.bf16.msra.mxu0 %v968
    %1012 = vmatpush.bf16.msra.mxu0 %v967
    %1013 = vmatmul.bf16.gmra.mxu0 %v858
    %v1014 = vpop.f32.mrf.mxu0
    %v1015 = vadd.f32 %v1001, %v1014
    %v1016 = vpop.f32.mrf.mxu0
    %v1017 = vadd.f32 %v1003, %v1016
    %1018 = vdwg.mxu0
    %v1019 = vpack.c.bf16 %v1015, %v1015
    %v1020 = vpack.c.bf16 %v1017, %v1017
    %1021 = vst [vmem:[%s7] sm:$0xf] %v1019
    %1022 = vst [vmem:[%s7 + $0x4] sm:$0xf] %v1020
    // Predicated region
    $region42: #{encoder_forward.1} parent=1 // pred_check
      _
    $region43: #{encoder_forward.1} parent=1 // pred_check_branch
      %1024 = sbr.rel (0) target = $region45
    $region44: #{encoder_forward.1} parent=1 // pred_region
      _
    $region45: #{encoder_forward.1} parent=1 // pred_fallthru
      _
    // Predicated region
    $region46: #{encoder_forward.1} parent=1 // pred_check
      _
    $region47: #{encoder_forward.1} parent=1 // pred_check_branch
      %1026 = sbr.rel (0) target = $region49
    $region48: #{encoder_forward.1} parent=1 // pred_region
      _
    $region49: #{encoder_forward.1} parent=1 // pred_fallthru
      _
    %1027 = vsyncpa [#allocation3], 1
    %1028 = vsyncpa [#allocation5], 1

</llo_original>
